<compile_context>
chip_gen: v6e
topology: v6e:2x2x1
jax: 0.10.0
libtpu: 0.0.40
codegen_flags: <defaults>
</compile_context>

<pallas_src>
import functools

import jax
import jax.numpy as jnp
import numpy as np
from jax import lax
from jax.experimental import pallas as pl
from jax.experimental.pallas import tpu as pltpu

_LANE = 128


def _round_up(x, m):
    return (x + m - 1) // m * m


def _vmem_limit_bytes():
    """Per-generation VMEM budget with headroom for compiler scratch."""
    cap = 128 * 1024 * 1024
    try:
        info = pltpu.get_tpu_info()
        cap = int(getattr(info, "vmem_capacity_bytes", cap))
    except Exception:
        pass
    # ~3/4 of physical, capped: v7x (64 MiB) -> 48 MiB, v5e/v6e (128 MiB) -> 96 MiB.
    return max(32 * 1024 * 1024, min(3 * cap // 4, 96 * 1024 * 1024))


# ---------------------------------------------------------------------------
# Kernels
# ---------------------------------------------------------------------------
def _nlinear_shared_kernel(x_ref, w_ref, b_ref, corr_ref, o_ref):
    # x_ref: (L, N) with N = lane-dense columns (either a channel tile of one
    #        batch, or flattened batch*channel columns);
    # w_ref: (P, L); b_ref: (P, 1) f32; corr_ref: (P, 1) f32 = 1 - rowsum(W);
    # o_ref: (P, N).
    x = x_ref[...]                                   # (L, N)
    seq_last = x[-1:, :].astype(jnp.float32)         # (1, N) last time step
    # One MXU matmul straight off the pipelined input (no pre-subtract).
    y = jnp.dot(w_ref[...], x, preferred_element_type=jnp.float32)  # (P, N)
    # Rank-1 correction: W@(x - s) + b + s == W@x + b + (1 - rowsum(W)) * s.
    y = y + b_ref[...] + corr_ref[...] * seq_last
    o_ref[...] = y.astype(o_ref.dtype)


def _nlinear_individual_kernel(x_ref, w_ref, b_ref, corr_ref, last_ref,
                               o_ref, acc_ref):
    # x_ref:    (B, TL, TC)   time-block of the inputs, channels on lanes
    # w_ref:    (TL, TP, TC)  per-channel weights, pre-transposed
    # b_ref:    (TP, TC) f32  bias
    # corr_ref: (TP, TC) f32  1 - sum_l W[c,p,l]
    # last_ref: (B, 1, TC)    seq_last
    # o_ref:    (B, TP, TC)
    # acc_ref:  (B, TP, TC) f32 VMEM scratch (persists across the time grid axis)
    l_blk = pl.program_id(2)
    B, TL, _ = x_ref.shape

    @pl.when(l_blk == 0)
    def _():
        acc_ref[...] = jnp.zeros_like(acc_ref)

    def batch_body(b, carry):
        # Per-batch accumulator stays in vregs: (TP, TC) f32 <= 16 vregs.
        def time_body(l, acc):
            w_l = w_ref[l].astype(jnp.float32)                    # (TP, TC)
            x_l = x_ref[b, pl.ds(l, 1), :].astype(jnp.float32)    # (1, TC)
            return acc + w_l * x_l                                # pure VPU MAC
        acc = lax.fori_loop(0, TL, time_body, acc_ref[b], unroll=min(8, TL))
        acc_ref[b] = acc
        return carry

    lax.fori_loop(0, B, batch_body, 0)

    @pl.when(l_blk == pl.num_programs(2) - 1)
    def _():
        bias = b_ref[...].astype(jnp.float32)[None, :, :]      # (1, TP, TC)
        corr = corr_ref[...].astype(jnp.float32)[None, :, :]   # (1, TP, TC)
        last = last_ref[...].astype(jnp.float32)                # (B, 1, TC)
        o_ref[...] = (acc_ref[...] + bias + corr * last).astype(o_ref.dtype)


# ---------------------------------------------------------------------------
# Wrappers
# ---------------------------------------------------------------------------
def _nlinear_shared(x, weight, bias):
    B, L, C = x.shape
    P, Lw = weight.shape
    assert Lw == L
    vmem = _vmem_limit_bytes()

    b_col = bias.reshape(P, 1).astype(jnp.float32)
    corr = 1.0 - jnp.sum(weight.astype(jnp.float32), axis=1, keepdims=True)  # (P,1)

    if C >= _LANE:
        # Operate directly on the (B, L, C) layout: no wrapper transpose/reshape
        # HBM round trips; channels (lanes) are tiled, batch is a grid axis.
        C_pad = _round_up(C, _LANE)
        xin = x if C_pad == C else jnp.pad(x, ((0, 0), (0, 0), (0, C_pad - C)))
        TC = next(t for t in (512, 256, 128) if C_pad % t == 0)
        out = pl.pallas_call(
            _nlinear_shared_kernel,
            out_shape=jax.ShapeDtypeStruct((B, P, C_pad), x.dtype),
            grid_spec=pltpu.PrefetchScalarGridSpec(
                num_scalar_prefetch=0,
                grid=(B, C_pad // TC),
                in_specs=[
                    pl.BlockSpec((pl.Squeezed(), L, TC), lambda b, c: (b, 0, c)),
                    pl.BlockSpec((P, L), lambda b, c: (0, 0)),   # weight resident
                    pl.BlockSpec((P, 1), lambda b, c: (0, 0)),
                    pl.BlockSpec((P, 1), lambda b, c: (0, 0)),
                ],
                out_specs=pl.BlockSpec((pl.Squeezed(), P, TC),
                                       lambda b, c: (b, 0, c)),
            ),
            compiler_params=pltpu.CompilerParams(
                dimension_semantics=("parallel", "parallel"),
                vmem_limit_bytes=vmem,
            ),
        )(xin, weight, b_col, corr)
        return out if C_pad == C else out[:, :, :C]

    # Small-C fallback: flatten (batch, channel) onto the lane axis so the
    # single MXU matmul still sees wide, lane-dense operands.
    BC = B * C
    x2d = jnp.transpose(x, (1, 0, 2)).reshape(L, BC)
    BC_pad = _round_up(BC, _LANE)
    if BC_pad != BC:
        x2d = jnp.pad(x2d, ((0, 0), (0, BC_pad - BC)))
    TN = _LANE
    for cand in (1024, 512, 256):                 # prefer big tiles, but keep
        if BC_pad % cand == 0 and BC_pad // cand >= 2:   # >= 2 steps (v7x 2 TCs)
            TN = cand
            break

    out2d = pl.pallas_call(
        _nlinear_shared_kernel,
        out_shape=jax.ShapeDtypeStruct((P, BC_pad), x.dtype),
        grid_spec=pltpu.PrefetchScalarGridSpec(
            num_scalar_prefetch=0,
            grid=(BC_pad // TN,),
            in_specs=[
                pl.BlockSpec((L, TN), lambda n: (0, n)),
                pl.BlockSpec((P, L), lambda n: (0, 0)),
                pl.BlockSpec((P, 1), lambda n: (0, 0)),
                pl.BlockSpec((P, 1), lambda n: (0, 0)),
            ],
            out_specs=pl.BlockSpec((P, TN), lambda n: (0, n)),
        ),
        compiler_params=pltpu.CompilerParams(
            dimension_semantics=("parallel",),
            vmem_limit_bytes=vmem,
        ),
    )(x2d, weight, b_col, corr)
    return jnp.transpose(out2d[:, :BC].reshape(P, B, C), (1, 0, 2))


def _nlinear_individual(x, weight, bias, *, tl=None, tp=None, tc=None):
    B, L, C = x.shape
    Cw, P, Lw = weight.shape
    assert (Cw, Lw) == (C, L)
    vmem = _vmem_limit_bytes()

    # --- tile sizes --------------------------------------------------------
    # channels on lanes
    if tc is None:
        tc = C if C <= _LANE else _LANE
    C_pad = C if tc == C else _round_up(C, tc)
    # pred_len blocked so the per-batch f32 loop carry stays ~16 vregs
    if tp is None:
        tp = P if P <= _LANE else _LANE
    P_pad = P if tp == P else _round_up(P, tp)
    # time (reduction) axis blocked so a weight block is a few MiB
    if tl is None:
        budget = 4 * 1024 * 1024                      # per (double-buffered) block
        tl = max(8, (min(L, budget // max(1, tp * tc * 4)) // 8) * 8)
    tl = min(tl, L)
    if tl >= L:
        tl, L_pad = L, L
    else:
        L_pad = _round_up(L, tl)

    seq_last = x[:, L - 1:L, :]                       # (B, 1, C) tiny side input

    # Layout plumbing in XLA, not the kernel: weight -> (L, P, C),
    # bias / corr -> (P, C); channels stay on lanes everywhere.
    w_t = jnp.transpose(weight, (2, 1, 0))            # (L, P, C)
    b_t = jnp.transpose(bias, (1, 0)).astype(jnp.float32)            # (P, C)
    corr = (1.0 - jnp.sum(weight.astype(jnp.float32), axis=-1)).T    # (P, C)

    # Zero padding: padded weight/bias/corr rows/cols contribute nothing.
    if C_pad != C or P_pad != P or L_pad != L:
        w_t = jnp.pad(w_t, ((0, L_pad - L), (0, P_pad - P), (0, C_pad - C)))
        b_t = jnp.pad(b_t, ((0, P_pad - P), (0, C_pad - C)))
        corr = jnp.pad(corr, ((0, P_pad - P), (0, C_pad - C)))
    if C_pad != C or L_pad != L:
        x = jnp.pad(x, ((0, 0), (0, L_pad - L), (0, C_pad - C)))
        seq_last = jnp.pad(seq_last, ((0, 0), (0, 0), (0, C_pad - C)))

    grid = (C_pad // tc, P_pad // tp, L_pad // tl)    # reduction axis innermost

    out = pl.pallas_call(
        _nlinear_individual_kernel,
        out_shape=jax.ShapeDtypeStruct((B, P_pad, C_pad), x.dtype),
        grid_spec=pltpu.PrefetchScalarGridSpec(
            num_scalar_prefetch=0,
            grid=grid,
            in_specs=[
                pl.BlockSpec((B, tl, tc), lambda c, p, l: (0, l, c)),
                pl.BlockSpec((tl, tp, tc), lambda c, p, l: (l, p, c)),
                pl.BlockSpec((tp, tc), lambda c, p, l: (p, c)),
                pl.BlockSpec((tp, tc), lambda c, p, l: (p, c)),
                pl.BlockSpec((B, 1, tc), lambda c, p, l: (0, 0, c)),
            ],
            out_specs=pl.BlockSpec((B, tp, tc), lambda c, p, l: (0, p, c)),
            scratch_shapes=[pltpu.VMEM((B, tp, tc), jnp.float32)],
        ),
        compiler_params=pltpu.CompilerParams(
            dimension_semantics=("parallel", "parallel", "arbitrary"),
            vmem_limit_bytes=vmem,
        ),
    )(x, w_t, b_t, corr, seq_last)

    return out[:, :P, :C]


@functools.partial(jax.jit, static_argnames=("individual",))
def nlinear_forward(x, weight, bias, individual=False):
    """x: (B, L, C); shared: weight (P, L), bias (P,)
                      individual: weight (C, P, L), bias (C, P)."""
    if individual:
        return _nlinear_individual(x, weight, bias)
    return _nlinear_shared(x, weight, bias)


def nlinear_reference(x, weight, bias, individual=False):
    """Pure-JAX reference mirroring the PyTorch forward."""
    seq_last = x[:, -1:, :]
    xn = x - seq_last
    if individual:
        y = jnp.einsum("cpl,blc->bpc", weight, xn) + bias.T[None]
    else:
        y = jnp.einsum("pl,blc->bpc", weight, xn) + bias[None, :, None]
    return y + seq_last


# ---------------------------------------------------------------------------
# Demo
# ---------------------------------------------------------------------------
if __name__ == "__main__":
    key = jax.random.PRNGKey(0)
    kx, kw, kb, kwi, kbi, kx2, kw2, kb2 = jax.random.split(key, 8)

    # --- small case (exercises the flattened shared path, single-block indiv)
    B, L, P, C = 2, 8, 4, 4  # batch, input_len, output_len, input_features
    x = jax.random.normal(kx, (B, L, C), dtype=jnp.float32)
    w_shared = jax.random.uniform(kw, (P, L), minval=-1.0, maxval=1.0) / jnp.sqrt(L)
    b_shared = jax.random.uniform(kb, (P,), minval=-1.0, maxval=1.0) / jnp.sqrt(L)
    w_indiv = jax.random.uniform(kwi, (C, P, L), minval=-1.0, maxval=1.0) / jnp.sqrt(L)
    b_indiv = jax.random.uniform(kbi, (C, P), minval=-1.0, maxval=1.0) / jnp.sqrt(L)

    out_shared = jax.block_until_ready(
        nlinear_forward(x, w_shared, b_shared, individual=False))
    np.testing.assert_allclose(
        np.asarray(out_shared),
        np.asarray(nlinear_reference(x, w_shared, b_shared, False)),
        rtol=1e-5, atol=1e-5)

    out_indiv = jax.block_until_ready(
        nlinear_forward(x, w_indiv, b_indiv, individual=True))
    np.testing.assert_allclose(
        np.asarray(out_indiv),
        np.asarray(nlinear_reference(x, w_indiv, b_indiv, True)),
        rtol=1e-5, atol=1e-5)

    # --- wider-channel case: exercises the direct (B, L, C) shared path and
    #     the blocked (channel, pred, time) individual grid with accumulation.
    B2, L2, P2, C2 = 2, 32, 16, 256
    x2 = jax.random.normal(kx2, (B2, L2, C2), dtype=jnp.float32)
    w2s = jax.random.uniform(kw2, (P2, L2), minval=-1.0, maxval=1.0) / jnp.sqrt(L2)
    b2s = jax.random.uniform(kb2, (P2,), minval=-1.0, maxval=1.0) / jnp.sqrt(L2)
    out2s = jax.block_until_ready(
        nlinear_forward(x2, w2s, b2s, individual=False))
    np.testing.assert_allclose(
        np.asarray(out2s),
        np.asarray(nlinear_reference(x2, w2s, b2s, False)),
        rtol=1e-5, atol=1e-5)

    w2i = jax.random.uniform(kw2, (C2, P2, L2), minval=-1.0, maxval=1.0) / jnp.sqrt(L2)
    b2i = jax.random.uniform(kb2, (C2, P2), minval=-1.0, maxval=1.0) / jnp.sqrt(L2)
    out2i = jax.block_until_ready(
        _nlinear_individual(x2, w2i, b2i, tl=8, tp=8, tc=128))  # force blocking
    np.testing.assert_allclose(
        np.asarray(out2i),
        np.asarray(nlinear_reference(x2, w2i, b2i, True)),
        rtol=1e-5, atol=1e-5)

    print("KERNEL_OK")
</pallas_src>

<mosaic_0001>
module attributes {stable_mosaic.version = 11 : i64} {
  func.func @_nlinear_shared_kernel(%arg0: i32, %arg1: memref<8x128xf32, #tpu.memory_space<vmem>>, %arg2: memref<4x8xf32, #tpu.memory_space<vmem>>, %arg3: memref<4x1xf32, #tpu.memory_space<vmem>>, %arg4: memref<4x1xf32, #tpu.memory_space<vmem>>, %arg5: memref<4x128xf32, #tpu.memory_space<vmem>>) attributes {dimension_semantics = [#tpu.dimension_semantics<parallel>], iteration_bounds = array<i64: 1>, scalar_prefetch = 0 : i64, scratch_operands = 0 : i64, tpu.core_type = #tpu.core_type<tc>, window_params = [{transform_indices = @transform_0, window_bounds = array<i64: 8, 128>}, {pipeline_mode = #tpu.pipeline_mode<synchronous>, transform_indices = @transform_1, window_bounds = array<i64: 4, 8>}, {pipeline_mode = #tpu.pipeline_mode<synchronous>, transform_indices = @transform_2, window_bounds = array<i64: 4, 1>}, {pipeline_mode = #tpu.pipeline_mode<synchronous>, transform_indices = @transform_3, window_bounds = array<i64: 4, 1>}, {transform_indices = @transform_4, window_bounds = array<i64: 4, 128>}]} {
    %c0 = arith.constant 0 : index
    %c0_0 = arith.constant 0 : index
    %0 = vector.load %arg1[%c0, %c0_0] : memref<8x128xf32, #tpu.memory_space<vmem>>, vector<8x128xf32>
    %1 = vector.extract_strided_slice %0 {offsets = [7, 0], sizes = [1, 128], strides = [1, 1]} : vector<8x128xf32> to vector<1x128xf32>
    %c0_1 = arith.constant 0 : index
    %c0_2 = arith.constant 0 : index
    %2 = vector.load %arg2[%c0_1, %c0_2] : memref<4x8xf32, #tpu.memory_space<vmem>>, vector<4x8xf32>
    %cst = arith.constant dense<0.000000e+00> : vector<4x128xf32>
    %3 = tpu.matmul %2, %0, %cst {dimension_numbers = #tpu.dot_dimension_numbers<[1], [0], [0], [1], [0, 0, 1, 1], [], []>} : vector<4x8xf32>, vector<8x128xf32>, vector<4x128xf32> -> vector<4x128xf32>
    %c0_3 = arith.constant 0 : index
    %c0_4 = arith.constant 0 : index
    %4 = vector.load %arg3[%c0_3, %c0_4] : memref<4x1xf32, #tpu.memory_space<vmem>>, vector<4x1xf32>
    %5 = vector.broadcast %4 : vector<4x1xf32> to vector<4x128xf32>
    %6 = arith.addf %3, %5 : vector<4x128xf32>
    %c0_5 = arith.constant 0 : index
    %c0_6 = arith.constant 0 : index
    %7 = vector.load %arg4[%c0_5, %c0_6] : memref<4x1xf32, #tpu.memory_space<vmem>>, vector<4x1xf32>
    %8 = vector.broadcast %7 : vector<4x1xf32> to vector<4x128xf32>
    %9 = vector.broadcast %1 : vector<1x128xf32> to vector<4x128xf32>
    %10 = arith.mulf %8, %9 : vector<4x128xf32>
    %11 = arith.addf %6, %10 : vector<4x128xf32>
    %c0_7 = arith.constant 0 : index
    %c0_8 = arith.constant 0 : index
    %12 = vector.load %arg5[%c0_7, %c0_8] : memref<4x128xf32, #tpu.memory_space<vmem>>, vector<4x128xf32>
    tpu.vector_store %arg5[%c0_7, %c0_8], %11 {strides = array<i32>} : memref<4x128xf32, #tpu.memory_space<vmem>>, vector<4x128xf32>,
    return
  }
  func.func @transform_0(%arg0: i32) -> (i32, i32) {
    %c0_i32 = arith.constant 0 : i32
    %c0_i32_0 = arith.constant 0 : i32
    return %c0_i32, %arg0 : i32, i32
  }
  func.func @transform_1(%arg0: i32) -> (i32, i32) {
    %c0_i32 = arith.constant 0 : i32
    %c0_i32_0 = arith.constant 0 : i32
    %c0_i32_1 = arith.constant 0 : i32
    return %c0_i32, %c0_i32_0 : i32, i32
  }
  func.func @transform_2(%arg0: i32) -> (i32, i32) {
    %c0_i32 = arith.constant 0 : i32
    %c0_i32_0 = arith.constant 0 : i32
    %c0_i32_1 = arith.constant 0 : i32
    return %c0_i32, %c0_i32_0 : i32, i32
  }
  func.func @transform_3(%arg0: i32) -> (i32, i32) {
    %c0_i32 = arith.constant 0 : i32
    %c0_i32_0 = arith.constant 0 : i32
    %c0_i32_1 = arith.constant 0 : i32
    return %c0_i32, %c0_i32_0 : i32, i32
  }
  func.func @transform_4(%arg0: i32) -> (i32, i32) {
    %c0_i32 = arith.constant 0 : i32
    %c0_i32_0 = arith.constant 0 : i32
    return %c0_i32, %arg0 : i32, i32
  }
}

</mosaic_0001>

<llo_original>
// kernel: nlinear_forward.1
$region0: #{nlinear_forward.1}
  #allocation0 [shape = 'u32[]', space=smem, size = 0x4, offset = 0x4, fixed_abs, tag = 'smem constant byte address 0x4 - core index']
  #allocation1 [shape = 'u32[144,128]{1,0:T(1,128)}', space=vmem, size = 0x12000, scoped, tag = 'internal scratch']
  %s0 = inlined_call_operand.vmem [shape: f32[8,128], index: 0, kind: input, shape index: {}]
  %s1 = inlined_call_operand.vmem [shape: f32[4,8], index: 1, kind: input, shape index: {}]
  %s2 = inlined_call_operand.vmem [shape: f32[4,1], index: 2, kind: input, shape index: {}]
  %s3 = inlined_call_operand.vmem [shape: f32[4,1], index: 3, kind: input, shape index: {}]
  %s4 = inlined_call_operand.vmem [shape: f32[4,128], index: 4, kind: output, shape index: {}]
  %s5 = sld [smem:[#allocation0]]
  $region26: #{nlinear_forward.1} parent=0
    _
  %s7 = ssub.s32 1, %s5
  %s8 = scalar_select 0, %s7, %s5
  // Predicated region
  $region2: #{nlinear_forward.1} parent=0 // pred_check
    _
  $region3: #{nlinear_forward.1} parent=0 // pred_check_branch
    %10 = sbr.rel (0) target = $region5
  $region4: #{nlinear_forward.1} parent=0 // pred_region
    _
  $region5: #{nlinear_forward.1} parent=0 // pred_fallthru
    _
  // Predicated region
  $region6: #{nlinear_forward.1} parent=0 // pred_check
    _
  $region7: #{nlinear_forward.1} parent=0 // pred_check_branch
    %12 = sbr.rel (0) target = $region9
  $region8: #{nlinear_forward.1} parent=0 // pred_region
    _
  $region9: #{nlinear_forward.1} parent=0 // pred_fallthru
    _
  // Predicated region
  $region10: #{nlinear_forward.1} parent=0 // pred_check
    _
  $region11: #{nlinear_forward.1} parent=0 // pred_check_branch
    %14 = sbr.rel (0) target = $region13
  $region12: #{nlinear_forward.1} parent=0 // pred_region
    _
  $region13: #{nlinear_forward.1} parent=0 // pred_fallthru
    _
  // Predicated region
  $region14: #{nlinear_forward.1} parent=0 // pred_check
    _
  $region15: #{nlinear_forward.1} parent=0 // pred_check_branch
    %16 = sbr.rel (0) target = $region17
  $region16: #{nlinear_forward.1} parent=0 // pred_region
    _
  $region17: #{nlinear_forward.1} parent=0 // pred_fallthru
    _
  %v17 = vld [vmem:[%s0] sm:$0xff]
  %v18 = vld [vmem:[%s1] sm:$0xf]
  %v19 = vld [vmem:[%s2] sm:$0xf]
  %21 = vset.pattern.permute.xlu0 0
  %22 = vperm.xlu0 %21, %v19
  %v23 = vpop.permute.xlu0 %22
  %vm25 = vcmask 64512
  %v27 = vsel %vm25, %v18, 0
  %29 = vmatprep.subr.mxu0 0.0
  %30 = vmatpush1.msra.mxu0 0.0
  %31 = vmatprep.subr.mxu0 0.0
  %32 = vmatpush1.msra.mxu0 0.0
  %33 = vmatprep.subr.mxu0 0.0
  %34 = vmatpush1.msra.mxu0 0.0
  %35 = vmatprep.subr.mxu0 0.0
  %36 = vmatpush1.msra.mxu0 0.0
  %37 = vmatprep.subr.mxu0 0.0
  %38 = vmatpush1.msra.mxu0 0.0
  %39 = vmatprep.subr.mxu0 0.0
  %40 = vmatpush1.msra.mxu0 0.0
  %41 = vmatprep.subr.mxu0 0.0
  %42 = vmatpush1.msra.mxu0 0.0
  %43 = vmatprep.subr.mxu0 0.0
  %44 = vmatpush1.msra.mxu0 0.0
  %45 = vmatprep.subr.mxu0 0.0
  %46 = vmatpush1.msra.mxu0 0.0
  %47 = vmatprep.subr.mxu0 0.0
  %48 = vmatpush1.msra.mxu0 0.0
  %49 = vmatprep.subr.mxu0 0.0
  %50 = vmatpush1.msra.mxu0 0.0
  %51 = vmatprep.subr.mxu0 0.0
  %52 = vmatpush1.msra.mxu0 0.0
  %53 = vmatprep.subr.mxu0 0.0
  %54 = vmatpush1.msra.mxu0 0.0
  %55 = vmatprep.subr.mxu0 0.0
  %56 = vmatpush1.msra.mxu0 0.0
  %57 = vmatprep.subr.mxu0 0.0
  %58 = vmatpush1.msra.mxu0 0.0
  %59 = vmatprep.subr.mxu0 0.0
  %60 = vmatpush1.msra.mxu0 %v17
  %61 = vmatprep.subr.mxu0 0.0
  %62 = vmatpush2.msra.mxu0 0.0
  %63 = vmatprep.subr.mxu0 0.0
  %64 = vmatpush2.msra.mxu0 0.0
  %65 = vmatprep.subr.mxu0 0.0
  %66 = vmatpush2.msra.mxu0 0.0
  %67 = vmatprep.subr.mxu0 0.0
  %68 = vmatpush2.msra.mxu0 0.0
  %69 = vmatprep.subr.mxu0 0.0
  %70 = vmatpush2.msra.mxu0 0.0
  %71 = vmatprep.subr.mxu0 0.0
  %72 = vmatpush2.msra.mxu0 0.0
  %73 = vmatprep.subr.mxu0 0.0
  %74 = vmatpush2.msra.mxu0 0.0
  %75 = vmatprep.subr.mxu0 0.0
  %76 = vmatpush2.msra.mxu0 0.0
  %77 = vmatprep.subr.mxu0 0.0
  %78 = vmatpush2.msra.mxu0 0.0
  %79 = vmatprep.subr.mxu0 0.0
  %80 = vmatpush2.msra.mxu0 0.0
  %81 = vmatprep.subr.mxu0 0.0
  %82 = vmatpush2.msra.mxu0 0.0
  %83 = vmatprep.subr.mxu0 0.0
  %84 = vmatpush2.msra.mxu0 0.0
  %85 = vmatprep.subr.mxu0 0.0
  %86 = vmatpush2.msra.mxu0 0.0
  %87 = vmatprep.subr.mxu0 0.0
  %88 = vmatpush2.msra.mxu0 0.0
  %89 = vmatprep.subr.mxu0 0.0
  %90 = vmatpush2.msra.mxu0 0.0
  %91 = vmatprep.subr.mxu0 0.0
  %92 = vmatpush2.msra.mxu0 0.0
  %93 = vmatprep.mubr.f32.mxu0 0.0
  %94 = vmatmul.mubr.f32.gmra.mxu0 %v27
  %v95 = vpop.f32.mrf.mxu0
  %v96 = vadd.f32 %v23, %v95
  %v97 = vpop.f32.mrf.mxu0
  %98 = vdwg.mxu0
  %v99 = vld [vmem:[%s3] sm:$0xf]
  %101 = vset.pattern.permute.xlu0 0
  %102 = vperm.xlu0 %101, %v99
  %v103 = vpop.permute.xlu0 %102
  %v105 = vlaneseq
  %v106 = vshrl.u32 %v105, 7
  %v107 = vsub.s32 7, %v106
  %v108 = vrot.slane %v17, %v107
  %v109 = vmul.f32 %v103, %v108
  %v110 = vadd.f32 %v96, %v109
  %111 = vst [vmem:[%s4] sm:$0xf] %v110
  // Predicated region
  $region18: #{nlinear_forward.1} parent=0 // pred_check
    _
  $region19: #{nlinear_forward.1} parent=0 // pred_check_branch
    %113 = sbr.rel (0) target = $region21
  $region20: #{nlinear_forward.1} parent=0 // pred_region
    _
  $region21: #{nlinear_forward.1} parent=0 // pred_fallthru
    _
  // Predicated region
  $region22: #{nlinear_forward.1} parent=0 // pred_check
    _
  $region23: #{nlinear_forward.1} parent=0 // pred_check_branch
    %115 = sbr.rel (0) target = $region25
  $region24: #{nlinear_forward.1} parent=0 // pred_region
    _
  $region25: #{nlinear_forward.1} parent=0 // pred_fallthru
    _

</llo_original>
